<compile_context>
chip_gen: v5e
topology: v5e:2x2
jax: 0.10.0
libtpu: 0.0.40
codegen_flags: <defaults>
</compile_context>

<pallas_src>
import jax
import jax.numpy as jnp
from jax.experimental import pallas as pl
from jax.experimental.pallas import tpu as pltpu

_INV_SQRT2 = 0.7071067811865476


def _round_up(a, m):
    return ((a + m - 1) // m) * m


def _tpu_vmem_capacity_bytes():
    try:
        return int(pltpu.get_tpu_info().vmem_capacity_bytes)
    except Exception:
        return 64 << 20  # conservative (v7x-sized) fallback


def _num_tensorcores():
    try:
        info = pltpu.get_tpu_info()
        for attr in ("num_cores", "num_tensorcores", "tensorcores_per_chip"):
            v = getattr(info, attr, None)
            if v:
                return int(v)
    except Exception:
        pass
    # Heuristic fallback: 64 MiB VMEM per core -> v7x-style 2-TC chip.
    return 2 if _tpu_vmem_capacity_bytes() <= (64 << 20) else 1


def mlp_kernel(x_ref, w1_ref, b1_ref, w2_ref, b2_ref, o_ref, acc_ref):
    # x_ref : (TN, IN)        w1_ref: (IN, TH)   b1_ref: (1, TH)   [BN folded]
    # w2_ref: (TH, OUT)       b2_ref: (1, OUT)
    # o_ref : (TN, OUT)       acc_ref: (TN, OUT) f32 scratch
    j = pl.program_id(1)

    @pl.when(j == 0)
    def _():
        acc_ref[...] = jnp.zeros_like(acc_ref)

    # fc1 chunk (BatchNorm eval folded into weight/bias); bf16 operands, f32 accumulation.
    x = x_ref[...].astype(w1_ref.dtype)
    h = jnp.dot(x, w1_ref[...], preferred_element_type=jnp.float32) + b1_ref[...]

    # GELU (exact, erf-based -- matches nn.GELU default), kept in f32.
    h = 0.5 * h * (1.0 + jax.lax.erf(h * _INV_SQRT2))

    # Dropout(p=0.5) in eval mode == identity.

    # fc2 chunk, accumulated in f32.
    acc_ref[...] += jnp.dot(h.astype(w2_ref.dtype), w2_ref[...],
                            preferred_element_type=jnp.float32)

    @pl.when(j == pl.num_programs(1) - 1)
    def _():
        o_ref[...] = (acc_ref[...] + b2_ref[...]).astype(o_ref.dtype)


def mlp_pallas(x, w1, b1, bn_scale, bn_shift, w2, b2, *,
               tile_n=512, matmul_dtype=jnp.bfloat16):
    N, in_f = x.shape
    hid = w1.shape[1]
    out_f = w2.shape[1]

    b1 = jnp.reshape(b1, (1, hid)).astype(jnp.float32)
    b2 = jnp.reshape(b2, (1, out_f)).astype(jnp.float32)
    bn_scale = jnp.reshape(bn_scale, (1, hid)).astype(jnp.float32)
    bn_shift = jnp.reshape(bn_shift, (1, hid)).astype(jnp.float32)

    # ---- fold BatchNorm1d (eval mode, running stats) into fc1 ----
    w1f = w1.astype(jnp.float32) * bn_scale           # (in_f, hid)
    b1f = b1 * bn_scale + bn_shift                    # (1, hid)
    w2f = w2.astype(jnp.float32)                      # (hid, out_f)

    vmem_cap = _tpu_vmem_capacity_bytes()
    num_tc = _num_tensorcores()

    # ---- batch tile: big, multiple of 8; >=2 grid steps only where megacore exists ----
    if num_tc >= 2 and N >= 16:
        tn = min(tile_n, _round_up(max(pl.cdiv(N, num_tc), 8), 8))
    else:
        tn = min(tile_n, _round_up(N, 8))
    tn = max(8, _round_up(tn, 8))

    w_item = 2 if matmul_dtype == jnp.bfloat16 else 4

    def est_vmem(tn_, th_):
        return int(
            2 * tn_ * in_f * 4                            # x tile (f32), double-buffered
            + 2 * (in_f * th_ + th_ * out_f) * w_item     # w1/w2 chunks, double-buffered
            + 2 * (th_ + out_f) * 4                       # biases, double-buffered
            + 2 * tn_ * out_f * 4                         # output tile, double-buffered
            + tn_ * out_f * 4                             # f32 accumulator scratch
            + 2 * tn_ * th_ * 4)                          # h intermediates / headroom

    budget = int(0.70 * vmem_cap)
    th = hid                                              # single chunk if it fits
    if est_vmem(tn, th) > budget:
        th = _round_up(hid, 128)
        while th > 128 and est_vmem(tn, th) > budget:
            th = max(128, _round_up(th // 2, 128))
        while tn > 8 and est_vmem(tn, th) > budget:
            tn = max(8, _round_up(tn // 2, 8))

    # ---- hidden padding only when the hidden dim is actually chunked ----
    hid_pad = hid if th == hid else _round_up(hid, th)
    if hid_pad != hid:
        w1f = jnp.zeros((in_f, hid_pad), jnp.float32).at[:, :hid].set(w1f)
        b1f = jnp.zeros((1, hid_pad), jnp.float32).at[:, :hid].set(b1f)
        w2f = jnp.zeros((hid_pad, out_f), jnp.float32).at[:hid, :].set(w2f)

    w1m = w1f.astype(matmul_dtype)
    w2m = w2f.astype(matmul_dtype)

    # ---- batch padding only when the tile does not divide N ----
    n_pad = _round_up(N, tn)
    x_in = x
    if n_pad != N:
        x_in = jnp.zeros((n_pad, in_f), x.dtype).at[:N, :].set(x)

    grid = (n_pad // tn, hid_pad // th)

    est = est_vmem(tn, th)
    vmem_limit = int(min(max(int(1.5 * est), 32 << 20), int(0.85 * vmem_cap)))

    cost = pl.CostEstimate(
        flops=2 * n_pad * (in_f * hid_pad + hid_pad * out_f),
        transcendentals=n_pad * hid_pad,
        bytes_accessed=int(4 * n_pad * (in_f + out_f)
                           + w_item * (in_f * hid_pad + hid_pad * out_f)
                           + 4 * (hid_pad + out_f)),
    )

    out_padded = pl.pallas_call(
        mlp_kernel,
        out_shape=jax.ShapeDtypeStruct((n_pad, out_f), x.dtype),
        grid_spec=pltpu.PrefetchScalarGridSpec(
            num_scalar_prefetch=0,
            grid=grid,
            in_specs=[
                pl.BlockSpec((tn, in_f), lambda i, j: (i, 0)),    # x tile
                pl.BlockSpec((in_f, th), lambda i, j: (0, j)),    # fc1 weight (BN folded)
                pl.BlockSpec((1, th), lambda i, j: (0, j)),       # fc1 bias   (BN folded)
                pl.BlockSpec((th, out_f), lambda i, j: (j, 0)),   # fc2 weight
                pl.BlockSpec((1, out_f), lambda i, j: (0, 0)),    # fc2 bias
            ],
            out_specs=pl.BlockSpec((tn, out_f), lambda i, j: (i, 0)),
            scratch_shapes=[pltpu.VMEM((tn, out_f), jnp.float32)],
        ),
        compiler_params=pltpu.CompilerParams(
            dimension_semantics=("parallel", "arbitrary"),
            vmem_limit_bytes=vmem_limit,
        ),
        cost_estimate=cost,
    )(x_in, w1m, b1f, w2m, b2)

    if n_pad != N:
        out_padded = out_padded[:N]
    return out_padded


def reference_mlp(x, w1, b1, bn_scale, bn_shift, w2, b2):
    h = x @ w1 + b1
    h = h * bn_scale + bn_shift
    h = 0.5 * h * (1.0 + jax.lax.erf(h * _INV_SQRT2))
    return h @ w2 + b2


if __name__ == "__main__":
    # Small shapes consistent with the module's forward: x is (batch, in_features)
    batch, in_features, hidden_features, out_features = 64, 32, 64, 32

    key = jax.random.PRNGKey(0)
    kx, k1, kb1, k2, kb2 = jax.random.split(key, 5)

    x = jax.random.normal(kx, (batch, in_features), dtype=jnp.float32)

    # Deterministic Linear init (PyTorch-style uniform(-1/sqrt(fan_in), 1/sqrt(fan_in)))
    lim1 = 1.0 / jnp.sqrt(jnp.float32(in_features))
    w1 = jax.random.uniform(k1, (in_features, hidden_features), jnp.float32, -lim1, lim1)
    b1 = jax.random.uniform(kb1, (1, hidden_features), jnp.float32, -lim1, lim1)

    lim2 = 1.0 / jnp.sqrt(jnp.float32(hidden_features))
    w2 = jax.random.uniform(k2, (hidden_features, out_features), jnp.float32, -lim2, lim2)
    b2 = jax.random.uniform(kb2, (1, out_features), jnp.float32, -lim2, lim2)

    # BatchNorm1d fresh init (eval mode): gamma=1, beta=0, running_mean=0, running_var=1
    eps = 1e-5
    gamma = jnp.ones((1, hidden_features), jnp.float32)
    beta = jnp.zeros((1, hidden_features), jnp.float32)
    running_mean = jnp.zeros((1, hidden_features), jnp.float32)
    running_var = jnp.ones((1, hidden_features), jnp.float32)
    bn_scale = gamma / jnp.sqrt(running_var + eps)
    bn_shift = beta - running_mean * bn_scale

    ref = reference_mlp(x, w1, b1, bn_scale, bn_shift, w2, b2)

    # Default path: bf16 MXU operands, f32 accumulation -> bf16-appropriate tolerance.
    out = mlp_pallas(x, w1, b1, bn_scale, bn_shift, w2, b2)
    out = jax.block_until_ready(out)
    assert out.shape == (batch, out_features)
    assert jnp.allclose(out, ref, atol=2e-2, rtol=2e-2), "bf16 path mismatch vs reference"

    # Exact path: f32 matmul operands, tight tolerance.
    out_f32 = mlp_pallas(x, w1, b1, bn_scale, bn_shift, w2, b2,
                         matmul_dtype=jnp.float32)
    out_f32 = jax.block_until_ready(out_f32)
    assert jnp.allclose(out_f32, ref, atol=1e-5, rtol=1e-5), "f32 path mismatch vs reference"

    print("KERNEL_OK")
</pallas_src>

<mosaic_0001>
module attributes {stable_mosaic.version = 11 : i64} {
  func.func @mlp_kernel(%arg0: i32, %arg1: i32, %arg2: memref<32x32xf32, #tpu.memory_space<vmem>>, %arg3: memref<32x64xbf16, #tpu.memory_space<vmem>>, %arg4: memref<1x64xf32, #tpu.memory_space<vmem>>, %arg5: memref<64x32xbf16, #tpu.memory_space<vmem>>, %arg6: memref<1x32xf32, #tpu.memory_space<vmem>>, %arg7: memref<32x32xf32, #tpu.memory_space<vmem>>, %arg8: memref<32x32xf32, #tpu.memory_space<vmem>>) attributes {dimension_semantics = [#tpu.dimension_semantics<parallel>, #tpu.dimension_semantics<arbitrary>], iteration_bounds = array<i64: 2, 1>, scalar_prefetch = 0 : i64, scratch_operands = 1 : i64, tpu.core_type = #tpu.core_type<tc>, window_params = [{transform_indices = @transform_0, window_bounds = array<i64: 32, 32>}, {transform_indices = @transform_1, window_bounds = array<i64: 32, 64>}, {transform_indices = @transform_2, window_bounds = array<i64: 1, 64>}, {transform_indices = @transform_3, window_bounds = array<i64: 64, 32>}, {pipeline_mode = #tpu.pipeline_mode<synchronous>, transform_indices = @transform_4, window_bounds = array<i64: 1, 32>}, {transform_indices = @transform_5, window_bounds = array<i64: 32, 32>}]} {
    %c0_i32 = arith.constant 0 : i32
    %0 = arith.cmpi eq, %arg1, %c0_i32 : i32
    %1 = arith.extui %0 : i1 to i32
    %c0_i32_0 = arith.constant 0 : i32
    %2 = arith.cmpi ne, %1, %c0_i32_0 : i32
    scf.if %2 {
      %cst_18 = arith.constant 0.000000e+00 : f32
      %27 = vector.broadcast %cst_18 : f32 to vector<32x32xf32>
      %c0_19 = arith.constant 0 : index
      %c0_20 = arith.constant 0 : index
      %28 = vector.load %arg8[%c0_19, %c0_20] : memref<32x32xf32, #tpu.memory_space<vmem>>, vector<32x32xf32>
      tpu.vector_store %arg8[%c0_19, %c0_20], %27 {strides = array<i32>} : memref<32x32xf32, #tpu.memory_space<vmem>>, vector<32x32xf32>,
    } else {
    }
    %c0 = arith.constant 0 : index
    %c0_1 = arith.constant 0 : index
    %3 = vector.load %arg2[%c0, %c0_1] : memref<32x32xf32, #tpu.memory_space<vmem>>, vector<32x32xf32>
    %4 = arith.truncf %3 : vector<32x32xf32> to vector<32x32xbf16>
    %c0_2 = arith.constant 0 : index
    %c0_3 = arith.constant 0 : index
    %5 = vector.load %arg3[%c0_2, %c0_3] : memref<32x64xbf16, #tpu.memory_space<vmem>>, vector<32x64xbf16>
    %cst = arith.constant dense<0.000000e+00> : vector<32x64xf32>
    %6 = tpu.matmul %4, %5, %cst {dimension_numbers = #tpu.dot_dimension_numbers<[1], [0], [0], [1], [0, 0, 1, 1], [], []>} : vector<32x32xbf16>, vector<32x64xbf16>, vector<32x64xf32> -> vector<32x64xf32>
    %c0_4 = arith.constant 0 : index
    %c0_5 = arith.constant 0 : index
    %7 = vector.load %arg4[%c0_4, %c0_5] : memref<1x64xf32, #tpu.memory_space<vmem>>, vector<1x64xf32>
    %8 = vector.broadcast %7 : vector<1x64xf32> to vector<32x64xf32>
    %9 = arith.addf %6, %8 : vector<32x64xf32>
    %cst_6 = arith.constant 5.000000e-01 : f32
    %10 = vector.broadcast %cst_6 : f32 to vector<32x64xf32>
    %11 = arith.mulf %10, %9 : vector<32x64xf32>
    %cst_7 = arith.constant 0.707106769 : f32
    %12 = vector.broadcast %cst_7 : f32 to vector<32x64xf32>
    %13 = arith.mulf %9, %12 : vector<32x64xf32>
    %14 = math.erf %13 : vector<32x64xf32>
    %cst_8 = arith.constant 1.000000e+00 : f32
    %15 = vector.broadcast %cst_8 : f32 to vector<32x64xf32>
    %16 = arith.addf %15, %14 : vector<32x64xf32>
    %17 = arith.mulf %11, %16 : vector<32x64xf32>
    %c0_9 = arith.constant 0 : index
    %c0_10 = arith.constant 0 : index
    %18 = vector.load %arg8[%c0_9, %c0_10] : memref<32x32xf32, #tpu.memory_space<vmem>>, vector<32x32xf32>
    %19 = arith.truncf %17 : vector<32x64xf32> to vector<32x64xbf16>
    %c0_11 = arith.constant 0 : index
    %c0_12 = arith.constant 0 : index
    %20 = vector.load %arg5[%c0_11, %c0_12] : memref<64x32xbf16, #tpu.memory_space<vmem>>, vector<64x32xbf16>
    %cst_13 = arith.constant dense<0.000000e+00> : vector<32x32xf32>
    %21 = tpu.matmul %19, %20, %cst_13 {dimension_numbers = #tpu.dot_dimension_numbers<[1], [0], [0], [1], [0, 0, 1, 1], [], []>} : vector<32x64xbf16>, vector<64x32xbf16>, vector<32x32xf32> -> vector<32x32xf32>
    %22 = arith.addf %18, %21 : vector<32x32xf32>
    %c0_14 = arith.constant 0 : index
    %c0_15 = arith.constant 0 : index
    %23 = vector.load %arg8[%c0_14, %c0_15] : memref<32x32xf32, #tpu.memory_space<vmem>>, vector<32x32xf32>
    tpu.vector_store %arg8[%c0_14, %c0_15], %22 {strides = array<i32>} : memref<32x32xf32, #tpu.memory_space<vmem>>, vector<32x32xf32>,
    %c0_i32_16 = arith.constant 0 : i32
    %24 = arith.cmpi eq, %arg1, %c0_i32_16 : i32
    %25 = arith.extui %24 : i1 to i32
    %c0_i32_17 = arith.constant 0 : i32
    %26 = arith.cmpi ne, %25, %c0_i32_17 : i32
    scf.if %26 {
      %c0_18 = arith.constant 0 : index
      %c0_19 = arith.constant 0 : index
      %27 = vector.load %arg8[%c0_18, %c0_19] : memref<32x32xf32, #tpu.memory_space<vmem>>, vector<32x32xf32>
      %c0_20 = arith.constant 0 : index
      %c0_21 = arith.constant 0 : index
      %28 = vector.load %arg6[%c0_20, %c0_21] : memref<1x32xf32, #tpu.memory_space<vmem>>, vector<1x32xf32>
      %29 = vector.broadcast %28 : vector<1x32xf32> to vector<32x32xf32>
      %30 = arith.addf %27, %29 : vector<32x32xf32>
      %c0_22 = arith.constant 0 : index
      %c0_23 = arith.constant 0 : index
      %31 = vector.load %arg7[%c0_22, %c0_23] : memref<32x32xf32, #tpu.memory_space<vmem>>, vector<32x32xf32>
      tpu.vector_store %arg7[%c0_22, %c0_23], %30 {strides = array<i32>} : memref<32x32xf32, #tpu.memory_space<vmem>>, vector<32x32xf32>,
    } else {
    }
    return
  }
  func.func @transform_0(%arg0: i32, %arg1: i32) -> (i32, i32) {
    %c0_i32 = arith.constant 0 : i32
    %c0_i32_0 = arith.constant 0 : i32
    return %arg0, %c0_i32 : i32, i32
  }
  func.func @transform_1(%arg0: i32, %arg1: i32) -> (i32, i32) {
    %c0_i32 = arith.constant 0 : i32
    %c0_i32_0 = arith.constant 0 : i32
    return %c0_i32, %arg1 : i32, i32
  }
  func.func @transform_2(%arg0: i32, %arg1: i32) -> (i32, i32) {
    %c0_i32 = arith.constant 0 : i32
    %c0_i32_0 = arith.constant 0 : i32
    return %c0_i32, %arg1 : i32, i32
  }
  func.func @transform_3(%arg0: i32, %arg1: i32) -> (i32, i32) {
    %c0_i32 = arith.constant 0 : i32
    %c0_i32_0 = arith.constant 0 : i32
    return %arg1, %c0_i32 : i32, i32
  }
  func.func @transform_4(%arg0: i32, %arg1: i32) -> (i32, i32) {
    %c0_i32 = arith.constant 0 : i32
    %c0_i32_0 = arith.constant 0 : i32
    %c0_i32_1 = arith.constant 0 : i32
    return %c0_i32, %c0_i32_0 : i32, i32
  }
  func.func @transform_5(%arg0: i32, %arg1: i32) -> (i32, i32) {
    %c0_i32 = arith.constant 0 : i32
    %c0_i32_0 = arith.constant 0 : i32
    return %arg0, %c0_i32 : i32, i32
  }
}

</mosaic_0001>

<llo_original>
// kernel: tpu_custom_call.1
$region0: #{tpu_custom_call.1}
  #allocation0 [shape = 'u32[]', space=smem, size = 0x4, offset = 0x4, fixed_abs, tag = 'smem constant byte address 0x4 - core index']
  #allocation1 [shape = 'u32[72,128]{1,0:T(1,128)}', space=vmem, size = 0x9000, scoped, tag = 'internal scratch']
  #allocation2 [shape = 'f32[32,32]{1,0:T(8,128)}', space=vmem, size = 0x4000, scoped, tag = 'scratch operand']
  %s0 = inlined_call_operand.vmem [shape: f32[64,32], index: 0, kind: input, shape index: {}]
  %s1 = inlined_call_operand.vmem [shape: bf16[32,64], index: 1, kind: input, shape index: {}]
  %s2 = inlined_call_operand.vmem [shape: f32[1,64], index: 2, kind: input, shape index: {}]
  %s3 = inlined_call_operand.vmem [shape: bf16[64,32], index: 3, kind: input, shape index: {}]
  %s4 = inlined_call_operand.vmem [shape: f32[1,32], index: 4, kind: input, shape index: {}]
  %s5 = inlined_call_operand.vmem [shape: f32[64,32], index: 5, kind: output, shape index: {}]
  %s6 = sld [smem:[#allocation0]]
  $region61: #{tpu_custom_call.1} parent=0
    _
  %s8 = ssub.s32 1, %s6
  %s9 = scalar_select 0, %s8, %s6
  loop: start=0, step=1, limit=4
  $region2: #{tpu_custom_call.1} parent=0 // loop_pre_header
    _
  $region3: #{tpu_custom_call.1} parent=0 // loop_header
    %s11 = sphi 0, %s15
    %p12 = scmp.ge.s32.totalorder %s11, 4
    %s18 = sphi 0, %s30
    %s19 = sphi 0, %s26
    %s20 = sphi 0, %s18
    %s21 = sphi 0, %s19
    %s22 = sphi 0, %s20
    %s23 = sphi 0, %s21
    %s33 = sphi 0, %s35
    %s36 = sphi 0, %s33
    %s37 = sphi 0, %s36
    %s53 = sphi 0, %s37
    %s59 = sphi 0, %s61
    %s62 = sphi 0, %s59
    %s63 = sphi 0, %s62
    %s79 = sphi 0, %s63
    %s85 = sphi 0, %s87
    %s88 = sphi 0, %s85
    %s89 = sphi 0, %s88
    %s105 = sphi 0, %s89
    %s111 = sphi 0, %s113
    %s114 = sphi 0, %s111
    %s115 = sphi 0, %s114
    %s131 = sphi 0, %s115
    %s135 = sphi 0, %s135
    %s137 = sphi 0, %s135
    %s138 = sphi 0, %s137
    %s152 = sphi 0, %s138
    %s158 = sphi 0, %s160
    %s161 = sphi 0, %s158
    %s162 = sphi 0, %s161
    %s178 = sphi 0, %s162
  $region4: #{tpu_custom_call.1} parent=0 // loop_header_branch
    %14 = sbr.rel (%p12) target = $region8
  $region5: #{tpu_custom_call.1} parent=0 // loop_body
    %s16 = ssub.s32 %s11, 1
    %s17 = ssub.s32 %s11, 2
    %s24 = sadd.s32 1, %s19
    %p25 = scmp.ge.s32.totalorder %s24, 1
    %s26 = scalar_select %p25, 0, %s24
    %s27 = sadd.s32 1, %s18
    %s28 = scalar_select %p25, %s27, %s18
    %p29 = scmp.ge.s32.totalorder %s28, 2
    %s30 = scalar_select %p29, 0, %s28
    %s31 = ssub.s32 %s18, %s30
    %p32 = scmp.eq.s32.totalorder %s31, 0
    %s34 = sadd.s32 %s33, 1
    %s35 = scalar_select %p32, %s33, %s34
    %p38 = pneg %p32
    %p39 = scmp.eq.s32.totalorder %s11, 1
    %p40 = por %p38, %p39
    %p41 = scmp.ne.s32.totalorder %s33, %s36
    %p42 = scmp.eq.s32.totalorder %s11, 0
    %p43 = por %p41, %p42
    %p44 = scmp.ne.s32.totalorder %s33, %s36
    %p45 = scmp.eq.s32.totalorder %s16, 1
    %p46 = por %p44, %p45
    %p47 = scmp.ne.s32.totalorder %s36, %s37
    %p48 = scmp.eq.s32.totalorder %s16, 0
    %p49 = por %p47, %p48
    %p50 = scmp.ne.s32.totalorder %s36, %s37
    %p51 = scmp.eq.s32.totalorder %s17, 1
    %p52 = por %p50, %p51
    %p54 = scmp.ne.s32.totalorder %s37, %s53
    %p55 = scmp.eq.s32.totalorder %s17, 0
    %p56 = por %p54, %p55
    %s57 = ssub.s32 %s19, %s26
    %p58 = scmp.eq.s32.totalorder %s57, 0
    %s60 = sadd.s32 %s59, 1
    %s61 = scalar_select %p58, %s59, %s60
    %p64 = pneg %p58
    %p65 = scmp.eq.s32.totalorder %s11, 1
    %p66 = por %p64, %p65
    %p67 = scmp.ne.s32.totalorder %s59, %s62
    %p68 = scmp.eq.s32.totalorder %s11, 0
    %p69 = por %p67, %p68
    %p70 = scmp.ne.s32.totalorder %s59, %s62
    %p71 = scmp.eq.s32.totalorder %s16, 1
    %p72 = por %p70, %p71
    %p73 = scmp.ne.s32.totalorder %s62, %s63
    %p74 = scmp.eq.s32.totalorder %s16, 0
    %p75 = por %p73, %p74
    %p76 = scmp.ne.s32.totalorder %s62, %s63
    %p77 = scmp.eq.s32.totalorder %s17, 1
    %p78 = por %p76, %p77
    %p80 = scmp.ne.s32.totalorder %s63, %s79
    %p81 = scmp.eq.s32.totalorder %s17, 0
    %p82 = por %p80, %p81
    %s83 = ssub.s32 %s19, %s26
    %p84 = scmp.eq.s32.totalorder %s83, 0
    %s86 = sadd.s32 %s85, 1
    %s87 = scalar_select %p84, %s85, %s86
    %p90 = pneg %p84
    %p91 = scmp.eq.s32.totalorder %s11, 1
    %p92 = por %p90, %p91
    %p93 = scmp.ne.s32.totalorder %s85, %s88
    %p94 = scmp.eq.s32.totalorder %s11, 0
    %p95 = por %p93, %p94
    %p96 = scmp.ne.s32.totalorder %s85, %s88
    %p97 = scmp.eq.s32.totalorder %s16, 1
    %p98 = por %p96, %p97
    %p99 = scmp.ne.s32.totalorder %s88, %s89
    %p100 = scmp.eq.s32.totalorder %s16, 0
    %p101 = por %p99, %p100
    %p102 = scmp.ne.s32.totalorder %s88, %s89
    %p103 = scmp.eq.s32.totalorder %s17, 1
    %p104 = por %p102, %p103
    %p106 = scmp.ne.s32.totalorder %s89, %s105
    %p107 = scmp.eq.s32.totalorder %s17, 0
    %p108 = por %p106, %p107
    %s109 = ssub.s32 %s19, %s26
    %p110 = scmp.eq.s32.totalorder %s109, 0
    %s112 = sadd.s32 %s111, 1
    %s113 = scalar_select %p110, %s111, %s112
    %p116 = pneg %p110
    %p117 = scmp.eq.s32.totalorder %s11, 1
    %p118 = por %p116, %p117
    %p119 = scmp.ne.s32.totalorder %s111, %s114
    %p120 = scmp.eq.s32.totalorder %s11, 0
    %p121 = por %p119, %p120
    %p122 = scmp.ne.s32.totalorder %s111, %s114
    %p123 = scmp.eq.s32.totalorder %s16, 1
    %p124 = por %p122, %p123
    %p125 = scmp.ne.s32.totalorder %s114, %s115
    %p126 = scmp.eq.s32.totalorder %s16, 0
    %p127 = por %p125, %p126
    %p128 = scmp.ne.s32.totalorder %s114, %s115
    %p129 = scmp.eq.s32.totalorder %s17, 1
    %p130 = por %p128, %p129
    %p132 = scmp.ne.s32.totalorder %s115, %s131
    %p133 = scmp.eq.s32.totalorder %s17, 0
    %p134 = por %p132, %p133
    %s136 = sadd.s32 %s135, 1
    %p139 = scmp.eq.s32.totalorder %s11, 1
    %p140 = scmp.ne.s32.totalorder %s135, %s137
    %p141 = scmp.eq.s32.totalorder %s11, 0
    %p142 = por %p140, %p141
    %p143 = scmp.ne.s32.totalorder %s135, %s137
    %p144 = scmp.eq.s32.totalorder %s16, 1
    %p145 = por %p143, %p144
    %p146 = scmp.ne.s32.totalorder %s137, %s138
    %p147 = scmp.eq.s32.totalorder %s16, 0
    %p148 = por %p146, %p147
    %p149 = scmp.ne.s32.totalorder %s137, %s138
    %p150 = scmp.eq.s32.totalorder %s17, 1
    %p151 = por %p149, %p150
    %p153 = scmp.ne.s32.totalorder %s138, %s152
    %p154 = scmp.eq.s32.totalorder %s17, 0
    %p155 = por %p153, %p154
    %s156 = ssub.s32 %s18, %s30
    %p157 = scmp.eq.s32.totalorder %s156, 0
    %s159 = sadd.s32 %s158, 1
    %s160 = scalar_select %p157, %s158, %s159
    %p163 = pneg %p157
    %p164 = scmp.eq.s32.totalorder %s11, 1
    %p165 = por %p163, %p164
    %p166 = scmp.ne.s32.totalorder %s158, %s161
    %p167 = scmp.eq.s32.totalorder %s11, 0
    %p168 = por %p166, %p167
    %p169 = scmp.ne.s32.totalorder %s158, %s161
    %p170 = scmp.eq.s32.totalorder %s16, 1
    %p171 = por %p169, %p170
    %p172 = scmp.ne.s32.totalorder %s161, %s162
    %p173 = scmp.eq.s32.totalorder %s16, 0
    %p174 = por %p172, %p173
    %p175 = scmp.ne.s32.totalorder %s161, %s162
    %p176 = scmp.eq.s32.totalorder %s17, 1
    %p177 = por %p175, %p176
    %p179 = scmp.ne.s32.totalorder %s162, %s178
    %p180 = scmp.eq.s32.totalorder %s17, 0
    %p181 = por %p179, %p180
    %p182 = scmp.le.s32.totalorder 1, %s11
    %p183 = scmp.lt.s32.totalorder %s11, 3
    %p184 = pnand %p182, %p183
    %p185 = pneg %p184
    // Predicated region
    $region9: #{tpu_custom_call.1} parent=5 // pred_check
      _
    $region10: #{tpu_custom_call.1} parent=5 // pred_check_branch
      %187 = sbr.rel (%p184) target = $region12
    $region11: #{tpu_custom_call.1} parent=5 // pred_region
      %s188 = ssub.s32 %s11, 1
      // Predicated region
      $region13: #{tpu_custom_call.1} parent=11 // pred_check
        %p189 = pneg %p75
      $region14: #{tpu_custom_call.1} parent=11 // pred_check_branch
        %191 = sbr.rel (%p189) target = $region16
      $region15: #{tpu_custom_call.1} parent=11 // pred_region
        %p192 = scmp.lt.s32.totalorder %s21, 0
        %s193 = scalar_select %p192, %s21, 0
        %s194 = smul.addr %s193, 4
        %s195 = scalar_lea.vmem %s1, %s194
      $region16: #{tpu_custom_call.1} parent=11 // pred_fallthru
        _
      // Predicated region
      $region17: #{tpu_custom_call.1} parent=11 // pred_check
        %p196 = pneg %p101
      $region18: #{tpu_custom_call.1} parent=11 // pred_check_branch
        %198 = sbr.rel (%p196) target = $region20
      $region19: #{tpu_custom_call.1} parent=11 // pred_region
        %p199 = scmp.lt.s32.totalorder %s21, 0
        %s200 = scalar_select %p199, %s21, 0
        %s201 = scalar_lea.vmem %s2, %s200
      $region20: #{tpu_custom_call.1} parent=11 // pred_fallthru
        _
      // Predicated region
      $region21: #{tpu_custom_call.1} parent=11 // pred_check
        %p202 = pneg %p127
      $region22: #{tpu_custom_call.1} parent=11 // pred_check_branch
        %204 = sbr.rel (%p202) target = $region24
      $region23: #{tpu_custom_call.1} parent=11 // pred_region
        %s205 = smul.u32 8, %s21
        %p206 = scmp.lt.s32.totalorder %s205, 7
        %s207 = scalar_select %p206, %s205, 7
        %s208 = smul.addr %s207, 4
        %s209 = scalar_lea.vmem %s3, %s208
        %s210 = smul.u32 8, %s21
      $region24: #{tpu_custom_call.1} parent=11 // pred_fallthru
        _
      // Predicated region
      $region25: #{tpu_custom_call.1} parent=11 // pred_check
        %p211 = pneg %p148
      $region26: #{tpu_custom_call.1} parent=11 // pred_check_branch
        %213 = sbr.rel (%p211) target = $region28
      $region27: #{tpu_custom_call.1} parent=11 // pred_region
        _
      $region28: #{tpu_custom_call.1} parent=11 // pred_fallthru
        _
    $region12: #{tpu_custom_call.1} parent=5 // pred_fallthru
      _
    %p214 = scmp.lt.s32.totalorder %s11, 2
    // Predicated region
    $region29: #{tpu_custom_call.1} parent=5 // pred_check
      %p215 = pneg %p214
    $region30: #{tpu_custom_call.1} parent=5 // pred_check_branch
      %217 = sbr.rel (%p215) target = $region32
    $region31: #{tpu_custom_call.1} parent=5 // pred_region
      // Predicated region
      $region33: #{tpu_custom_call.1} parent=31 // pred_check
        %p218 = pneg %p43
      $region34: #{tpu_custom_call.1} parent=31 // pred_check_branch
        %220 = sbr.rel (%p218) target = $region36
      $region35: #{tpu_custom_call.1} parent=31 // pred_region
        %s221 = smul.u32 4, %s18
        %p222 = scmp.lt.s32.totalorder %s221, 7
        %s223 = scalar_select %p222, %s221, 7
        %s224 = smul.addr %s223, 8
        %s225 = scalar_lea.vmem %s0, %s224
        %s226 = smul.u32 4, %s18
      $region36: #{tpu_custom_call.1} parent=31 // pred_fallthru
        _
    $region32: #{tpu_custom_call.1} parent=5 // pred_fallthru
      _
    %p227 = scmp.le.s32.totalorder 1, %s11
    %p228 = scmp.lt.s32.totalorder %s11, 3
    %p229 = pnand %p227, %p228
    %p230 = pneg %p229
    // Predicated region
    $region37: #{tpu_custom_call.1} parent=5 // pred_check
      _
    $region38: #{tpu_custom_call.1} parent=5 // pred_check_branch
      %232 = sbr.rel (%p229) target = $region40
    $region39: #{tpu_custom_call.1} parent=5 // pred_region
      %s233 = ssub.s32 %s11, 1
      %s234 = smul.u32 4, %s20
      %p235 = scmp.lt.s32.totalorder %s234, 7
      %s236 = scalar_select %p235, %s234, 7
      %s237 = smul.addr %s236, 8
      %s238 = scalar_lea.vmem %s0, %s237
      %p239 = pneg %p49
      %p240 = pneg %p46
      %p241 = scmp.lt.s32.totalorder %s21, 0
      %s242 = scalar_select %p241, %s21, 0
      %s243 = smul.addr %s242, 4
      %s244 = scalar_lea.vmem %s1, %s243
      %p245 = pneg %p75
      %p246 = pneg %p72
      %p247 = scmp.lt.s32.totalorder %s21, 0
      %s248 = scalar_select %p247, %s21, 0
      %s249 = scalar_lea.vmem %s2, %s248
      %p250 = pneg %p101
      %p251 = pneg %p98
      %s252 = smul.u32 8, %s21
      %p253 = scmp.lt.s32.totalorder %s252, 7
      %s254 = scalar_select %p253, %s252, 7
      %s255 = smul.addr %s254, 4
      %s256 = scalar_lea.vmem %s3, %s255
      %p257 = pneg %p127
      %p258 = pneg %p124
      %p259 = pneg %p148
      %p260 = pneg %p145
      %p261 = pneg %p174
      %p262 = pneg %p171
      %s263 = smul.u32 4, %s20
      %p264 = scmp.lt.s32.totalorder %s263, 7
      %s265 = scalar_select %p264, %s263, 7
      %s266 = smul.addr %s265, 8
      %s267 = scalar_lea.vmem %s5, %s266
      %s268 = smul.u32 4, %s20
      %p269 = scmp.lt.s32.totalorder %s268, 7
      %s270 = scalar_select %p269, %s268, 7
      %s271 = smul.addr %s270, 8
      %s272 = scalar_lea.vmem %s0, %s271
      %s273 = smul.u32 4, %s20
      %p274 = scmp.lt.s32.totalorder %s21, 0
      %s275 = scalar_select %p274, %s21, 0
      %s276 = smul.addr %s275, 4
      %s277 = scalar_lea.vmem %s1, %s276
      %p278 = scmp.lt.s32.totalorder %s21, 0
      %s279 = scalar_select %p278, %s21, 0
      %s280 = scalar_lea.vmem %s2, %s279
      %s281 = smul.u32 8, %s21
      %p282 = scmp.lt.s32.totalorder %s281, 7
      %s283 = scalar_select %p282, %s281, 7
      %s284 = smul.addr %s283, 4
      %s285 = scalar_lea.vmem %s3, %s284
      %s286 = smul.u32 8, %s21
      %s287 = smul.u32 4, %s20
      %p288 = scmp.lt.s32.totalorder %s287, 7
      %s289 = scalar_select %p288, %s287, 7
      %s290 = smul.addr %s289, 8
      %s291 = scalar_lea.vmem %s5, %s290
      %s292 = smul.u32 4, %s20
      %p294 = scmp.eq.s32.totalorder %s21, 0
      // Predicated region
      $region41: #{tpu_custom_call.1} parent=39 // pred_check
        %p295 = pneg %p294
      $region42: #{tpu_custom_call.1} parent=39 // pred_check_branch
        %297 = sbr.rel (%p295) target = $region44
      $region43: #{tpu_custom_call.1} parent=39 // pred_region
        %vm298 = vcmask 261120
        %299 = vst.msk [vmem:[#allocation2] sm:$0xff] %vm298, 0.0
        %300 = vst.msk [vmem:[#allocation2 + $0x8] sm:$0xff] %vm298, 0.0
        %301 = vst.msk [vmem:[#allocation2 + $0x10] sm:$0xff] %vm298, 0.0
        %302 = vst.msk [vmem:[#allocation2 + $0x18] sm:$0xff] %vm298, 0.0
      $region44: #{tpu_custom_call.1} parent=39 // pred_fallthru
        _
      %v303 = vld [vmem:[%s272] sm:$0xff]
      %v304 = vld [vmem:[%s272 + $0x8] sm:$0xff]
      %v305 = vld [vmem:[%s272 + $0x10] sm:$0xff]
      %v306 = vld [vmem:[%s272 + $0x18] sm:$0xff]
      %v307 = vpack.c.bf16 %v304, %v303
      %v308 = vpack.c.bf16 %v306, %v305
      %v309 = vld [vmem:[%s277] sm:$0xf]
      %v310 = vld [vmem:[%s277 + $0x4] sm:$0xf]
      %v311 = vld [vmem:[%s277 + $0x8] sm:$0xf]
      %v312 = vld [vmem:[%s277 + $0xc] sm:$0xf]
      %v313 = vld [vmem:[%s280] sm:$0x1]
      %v315 = vperm.slane %v313, 0
      %v321 = vunpack.c.l.b16 %v309
      %v322 = vunpack.c.l.b16 %v310
      %v323 = vunpack.c.l.b16 %v311
      %v324 = vunpack.c.l.b16 %v312
      %v325 = vpack.c.b16 %v322, %v321
      %v326 = vpack.c.b16 %v324, %v323
      %vm329 = vcmask 261120
      %v331 = vsel %vm329, %v307, 0
      %v334 = vsel %vm329, %v308, 0
      %336 = vmatpush.bf16.msra.mxu0 0
      %337 = vmatpush.bf16.msra.mxu0 0
      %338 = vmatpush.bf16.msra.mxu0 0
      %339 = vmatpush.bf16.msra.mxu0 0
      %340 = vmatpush.bf16.msra.mxu0 0
      %341 = vmatpush.bf16.msra.mxu0 0
      %342 = vmatpush.bf16.msra.mxu0 %v326
      %343 = vmatpush.bf16.msra.mxu0 %v325
      %344 = vmatmul.bf16.gmra.mxu0 %v331
      %v345 = vpop.f32.mrf.mxu0
      %v346 = vadd.f32 %v315, %v345
      %v347 = vpop.f32.mrf.mxu0
      %v348 = vadd.f32 %v315, %v347
      %349 = vmatmul.bf16.gmra.mxu0 %v334
      %v350 = vpop.f32.mrf.mxu0
      %v351 = vadd.f32 %v315, %v350
      %v352 = vpop.f32.mrf.mxu0
      %v353 = vadd.f32 %v315, %v352
      %354 = vdwg.mxu0
      %v355 = vmul.f32 %v346, 0.5
      %v356 = vmul.f32 %v348, 0.5
      %v357 = vmul.f32 %v351, 0.5
      %v358 = vmul.f32 %v353, 0.5
      %v359 = vmul.f32 %v346, 0.70710677
      %v360 = vmul.f32 %v348, 0.70710677
      %v361 = vmul.f32 %v351, 0.70710677
      %v362 = vmul.f32 %v353, 0.70710677
      %v363 = vmul.f32 %v359, %v359
      %v364 = vmin.f32 16.0, %v363
      %v365 = vmul.f32 %v364, 2.1237322e-06
      %v366 = vadd.f32 %v365, 0.00028619796
      %v367 = vmul.f32 %v364, %v366
      %v368 = vadd.f32 %v367, 0.0036580483
      %v369 = vmul.f32 %v364, %v368
      %v370 = vadd.f32 %v369, 0.05243302
      %v371 = vmul.f32 %v364, %v370
      %v372 = vadd.f32 %v371, 0.18741608
      %v373 = vmul.f32 %v364, %v372
      %v374 = vadd.f32 %v373, 1.1283791
      %v375 = vmul.f32 %v359, %v374
      %v376 = vmul.f32 %v364, 3.8918573e-05
      %v377 = vadd.f32 %v376, 0.001143296
      %v378 = vmul.f32 %v364, %v377
      %v379 = vadd.f32 %v378, 0.014752088
      %v380 = vmul.f32 %v364, %v379
      %v381 = vadd.f32 %v380, 0.112945676
      %v382 = vmul.f32 %v364, %v381
      %v383 = vadd.f32 %v382, 0.4994258
      %v384 = vmul.f32 %v364, %v383
      %v385 = vadd.f32 %v384, 1.0
      %v386 = vrcp.pop %v385
      %v387 = vmul.f32 %v385, %v386
      %v388 = vsub.f32 1.0, %v387
      %v389 = vmul.f32 %v386, %v388
      %v390 = vadd.f32 %v386, %v389
      %vm391 = vweird.f32 %v385
      %vm392 = vweird.f32 %v386
      %vm393 = vmor %vm391, %vm392
      %v394 = vsel %vm393, %v386, %v390
      %v395 = vand.u32 2147483647, %v385
      %vm396 = vcmp.eq.f32.partialorder %v395, 8.507059e+37
      %v397 = vand.u32 %v385, 2147483648
      %v398 = vor.u32 1.1754944e-38, %v397
      %v399 = vsel %vm396, %v398, %v394
      %v400 = vmul.f32 %v375, %v399
      %v401 = vmin.f32 %v400, 1.0
      %v402 = vmax.f32 %v401, -1.0
      %v403 = vmul.f32 %v360, %v360
      %v404 = vmin.f32 16.0, %v403
      %v405 = vmul.f32 %v404, 2.1237322e-06
      %v406 = vadd.f32 %v405, 0.00028619796
      %v407 = vmul.f32 %v404, %v406
      %v408 = vadd.f32 %v407, 0.0036580483
      %v409 = vmul.f32 %v404, %v408
      %v410 = vadd.f32 %v409, 0.05243302
      %v411 = vmul.f32 %v404, %v410
      %v412 = vadd.f32 %v411, 0.18741608
      %v413 = vmul.f32 %v404, %v412
      %v414 = vadd.f32 %v413, 1.1283791
      %v415 = vmul.f32 %v360, %v414
      %v416 = vmul.f32 %v404, 3.8918573e-05
      %v417 = vadd.f32 %v416, 0.001143296
      %v418 = vmul.f32 %v404, %v417
      %v419 = vadd.f32 %v418, 0.014752088
      %v420 = vmul.f32 %v404, %v419
      %v421 = vadd.f32 %v420, 0.112945676
      %v422 = vmul.f32 %v404, %v421
      %v423 = vadd.f32 %v422, 0.4994258
      %v424 = vmul.f32 %v404, %v423
      %v425 = vadd.f32 %v424, 1.0
      %v426 = vrcp.pop %v425
      %v427 = vmul.f32 %v425, %v426
      %v428 = vsub.f32 1.0, %v427
      %v429 = vmul.f32 %v426, %v428
      %v430 = vadd.f32 %v426, %v429
      %vm431 = vweird.f32 %v425
      %vm432 = vweird.f32 %v426
      %vm433 = vmor %vm431, %vm432
      %v434 = vsel %vm433, %v426, %v430
      %v435 = vand.u32 2147483647, %v425
      %vm436 = vcmp.eq.f32.partialorder %v435, 8.507059e+37
      %v437 = vand.u32 %v425, 2147483648
      %v438 = vor.u32 1.1754944e-38, %v437
      %v439 = vsel %vm436, %v438, %v434
      %v440 = vmul.f32 %v415, %v439
      %v441 = vmin.f32 %v440, 1.0
      %v442 = vmax.f32 %v441, -1.0
      %v443 = vmul.f32 %v361, %v361
      %v444 = vmin.f32 16.0, %v443
      %v445 = vmul.f32 %v444, 2.1237322e-06
      %v446 = vadd.f32 %v445, 0.00028619796
      %v447 = vmul.f32 %v444, %v446
      %v448 = vadd.f32 %v447, 0.0036580483
      %v449 = vmul.f32 %v444, %v448
      %v450 = vadd.f32 %v449, 0.05243302
      %v451 = vmul.f32 %v444, %v450
      %v452 = vadd.f32 %v451, 0.18741608
      %v453 = vmul.f32 %v444, %v452
      %v454 = vadd.f32 %v453, 1.1283791
      %v455 = vmul.f32 %v361, %v454
      %v456 = vmul.f32 %v444, 3.8918573e-05
      %v457 = vadd.f32 %v456, 0.001143296
      %v458 = vmul.f32 %v444, %v457
      %v459 = vadd.f32 %v458, 0.014752088
      %v460 = vmul.f32 %v444, %v459
      %v461 = vadd.f32 %v460, 0.112945676
      %v462 = vmul.f32 %v444, %v461
      %v463 = vadd.f32 %v462, 0.4994258
      %v464 = vmul.f32 %v444, %v463
      %v465 = vadd.f32 %v464, 1.0
      %v466 = vrcp.pop %v465
      %v467 = vmul.f32 %v465, %v466
      %v468 = vsub.f32 1.0, %v467
      %v469 = vmul.f32 %v466, %v468
      %v470 = vadd.f32 %v466, %v469
      %vm471 = vweird.f32 %v465
      %vm472 = vweird.f32 %v466
      %vm473 = vmor %vm471, %vm472
      %v474 = vsel %vm473, %v466, %v470
      %v475 = vand.u32 2147483647, %v465
      %vm476 = vcmp.eq.f32.partialorder %v475, 8.507059e+37
      %v477 = vand.u32 %v465, 2147483648
      %v478 = vor.u32 1.1754944e-38, %v477
      %v479 = vsel %vm476, %v478, %v474
      %v480 = vmul.f32 %v455, %v479
      %v481 = vmin.f32 %v480, 1.0
      %v482 = vmax.f32 %v481, -1.0
      %v483 = vmul.f32 %v362, %v362
      %v484 = vmin.f32 16.0, %v483
      %v485 = vmul.f32 %v484, 2.1237322e-06
      %v486 = vadd.f32 %v485, 0.00028619796
      %v487 = vmul.f32 %v484, %v486
      %v488 = vadd.f32 %v487, 0.0036580483
      %v489 = vmul.f32 %v484, %v488
      %v490 = vadd.f32 %v489, 0.05243302
      %v491 = vmul.f32 %v484, %v490
      %v492 = vadd.f32 %v491, 0.18741608
      %v493 = vmul.f32 %v484, %v492
      %v494 = vadd.f32 %v493, 1.1283791
      %v495 = vmul.f32 %v362, %v494
      %v496 = vmul.f32 %v484, 3.8918573e-05
      %v497 = vadd.f32 %v496, 0.001143296
      %v498 = vmul.f32 %v484, %v497
      %v499 = vadd.f32 %v498, 0.014752088
      %v500 = vmul.f32 %v484, %v499
      %v501 = vadd.f32 %v500, 0.112945676
      %v502 = vmul.f32 %v484, %v501
      %v503 = vadd.f32 %v502, 0.4994258
      %v504 = vmul.f32 %v484, %v503
      %v505 = vadd.f32 %v504, 1.0
      %v506 = vrcp.pop %v505
      %v507 = vmul.f32 %v505, %v506
      %v508 = vsub.f32 1.0, %v507
      %v509 = vmul.f32 %v506, %v508
      %v510 = vadd.f32 %v506, %v509
      %vm511 = vweird.f32 %v505
      %vm512 = vweird.f32 %v506
      %vm513 = vmor %vm511, %vm512
      %v514 = vsel %vm513, %v506, %v510
      %v515 = vand.u32 2147483647, %v505
      %vm516 = vcmp.eq.f32.partialorder %v515, 8.507059e+37
      %v517 = vand.u32 %v505, 2147483648
      %v518 = vor.u32 1.1754944e-38, %v517
      %v519 = vsel %vm516, %v518, %v514
      %v520 = vmul.f32 %v495, %v519
      %v521 = vmin.f32 %v520, 1.0
      %v522 = vmax.f32 %v521, -1.0
      %v523 = vadd.f32 %v402, 1.0
      %v524 = vadd.f32 %v442, 1.0
      %v525 = vadd.f32 %v482, 1.0
      %v526 = vadd.f32 %v522, 1.0
      %v527 = vmul.f32 %v355, %v523
      %v528 = vmul.f32 %v356, %v524
      %v529 = vmul.f32 %v357, %v525
      %v530 = vmul.f32 %v358, %v526
      %v531 = vld [vmem:[#allocation2] sm:$0xff]
      %v532 = vld [vmem:[#allocation2 + $0x8] sm:$0xff]
      %v533 = vld [vmem:[#allocation2 + $0x10] sm:$0xff]
      %v534 = vld [vmem:[#allocation2 + $0x18] sm:$0xff]
      %v535 = vpack.c.bf16 %v528, %v527
      %v536 = vpack.c.bf16 %v530, %v529
      %v537 = vld [vmem:[%s285] sm:$0xf]
      %v538 = vld [vmem:[%s285 + $0x4] sm:$0xf]
      %v539 = vld [vmem:[%s285 + $0x8] sm:$0xf]
      %v540 = vld [vmem:[%s285 + $0xc] sm:$0xf]
      %v541 = vld [vmem:[%s285 + $0x10] sm:$0xf]
      %v542 = vld [vmem:[%s285 + $0x14] sm:$0xf]
      %v543 = vld [vmem:[%s285 + $0x18] sm:$0xf]
      %v544 = vld [vmem:[%s285 + $0x1c] sm:$0xf]
      %v553 = vunpack.c.l.b16 %v537
      %v554 = vunpack.c.l.b16 %v538
      %v555 = vunpack.c.l.b16 %v539
      %v556 = vunpack.c.l.b16 %v540
      %v557 = vunpack.c.l.b16 %v541
      %v558 = vunpack.c.l.b16 %v542
      %v559 = vunpack.c.l.b16 %v543
      %v560 = vunpack.c.l.b16 %v544
      %v561 = vpack.c.b16 %v554, %v553
      %v562 = vpack.c.b16 %v556, %v555
      %v563 = vpack.c.b16 %v558, %v557
      %v564 = vpack.c.b16 %v560, %v559
      %vm569 = vcmask 523264
      %v571 = vsel %vm569, %v535, 0
      %v574 = vsel %vm569, %v536, 0
      %576 = vmatpush.bf16.msra.mxu0 0
      %577 = vmatpush.bf16.msra.mxu0 0
      %578 = vmatpush.bf16.msra.mxu0 0
      %579 = vmatpush.bf16.msra.mxu0 0
      %580 = vmatpush.bf16.msra.mxu0 %v564
      %581 = vmatpush.bf16.msra.mxu0 %v563
      %582 = vmatpush.bf16.msra.mxu0 %v562
      %583 = vmatpush.bf16.msra.mxu0 %v561
      %584 = vmatmul.bf16.gmra.mxu0 %v571
      %v585 = vpop.f32.mrf.mxu0
      %v586 = vadd.f32 0.0, %v585
      %v587 = vpop.f32.mrf.mxu0
      %v588 = vadd.f32 0.0, %v587
      %589 = vmatmul.bf16.gmra.mxu0 %v574
      %v590 = vpop.f32.mrf.mxu0
      %v591 = vadd.f32 0.0, %v590
      %v592 = vpop.f32.mrf.mxu0
      %v593 = vadd.f32 0.0, %v592
      %594 = vdwg.mxu0
      %v595 = vadd.f32 %v531, %v586
      %v596 = vadd.f32 %v532, %v588
      %v597 = vadd.f32 %v533, %v591
      %v598 = vadd.f32 %v534, %v593
      %599 = vst.msk [vmem:[#allocation2] sm:$0xff] %vm329, %v595
      %600 = vst.msk [vmem:[#allocation2 + $0x8] sm:$0xff] %vm329, %v596
      %601 = vst.msk [vmem:[#allocation2 + $0x10] sm:$0xff] %vm329, %v597
      %602 = vst.msk [vmem:[#allocation2 + $0x18] sm:$0xff] %vm329, %v598
      // Predicated region
      $region45: #{tpu_custom_call.1} parent=39 // pred_check
        %p603 = pneg %p294
      $region46: #{tpu_custom_call.1} parent=39 // pred_check_branch
        %605 = sbr.rel (%p603) target = $region48
      $region47: #{tpu_custom_call.1} parent=39 // pred_region
        %v606 = vld [vmem:[#allocation2] sm:$0xff]
        %v607 = vld [vmem:[#allocation2 + $0x8] sm:$0xff]
        %v608 = vld [vmem:[#allocation2 + $0x10] sm:$0xff]
        %v609 = vld [vmem:[#allocation2 + $0x18] sm:$0xff]
        %v610 = vld [vmem:[%s4] sm:$0x1]
        %v612 = vperm.slane %v610, 0
        %v614 = vadd.f32 %v606, %v612
        %v615 = vadd.f32 %v607, %v612
        %v616 = vadd.f32 %v608, %v612
        %v617 = vadd.f32 %v609, %v612
        %618 = vst.msk [vmem:[%s291] sm:$0xff] %vm329, %v614
        %619 = vst.msk [vmem:[%s291 + $0x8] sm:$0xff] %vm329, %v615
        %620 = vst.msk [vmem:[%s291 + $0x10] sm:$0xff] %vm329, %v616
        %621 = vst.msk [vmem:[%s291 + $0x18] sm:$0xff] %vm329, %v617
      $region48: #{tpu_custom_call.1} parent=39 // pred_fallthru
        _
      %s622 = smul.u32 4, %s20
      %p623 = scmp.lt.s32.totalorder %s622, 7
      %s624 = scalar_select %p623, %s622, 7
      %s625 = smul.addr %s624, 8
      %s626 = scalar_lea.vmem %s5, %s625
      // Predicated region
      $region49: #{tpu_custom_call.1} parent=39 // pred_check
        %p627 = pneg %p171
      $region50: #{tpu_custom_call.1} parent=39 // pred_check_branch
        %629 = sbr.rel (%p627) target = $region52
      $region51: #{tpu_custom_call.1} parent=39 // pred_region
        %s630 = smul.u32 4, %s20
      $region52: #{tpu_custom_call.1} parent=39 // pred_fallthru
        _
    $region40: #{tpu_custom_call.1} parent=5 // pred_fallthru
      _
    %p631 = scmp.le.s32.totalorder 2, %s11
    // Predicated region
    $region53: #{tpu_custom_call.1} parent=5 // pred_check
      %p632 = pneg %p631
    $region54: #{tpu_custom_call.1} parent=5 // pred_check_branch
      %634 = sbr.rel (%p632) target = $region56
    $region55: #{tpu_custom_call.1} parent=5 // pred_region
      %s635 = ssub.s32 %s11, 2
      // Predicated region
      $region57: #{tpu_custom_call.1} parent=55 // pred_check
        %p636 = pneg %p177
      $region58: #{tpu_custom_call.1} parent=55 // pred_check_branch
        %638 = sbr.rel (%p636) target = $region60
      $region59: #{tpu_custom_call.1} parent=55 // pred_region
        %s639 = smul.u32 4, %s22
        %p640 = scmp.lt.s32.totalorder %s639, 7
        %s641 = scalar_select %p640, %s639, 7
        %s642 = smul.addr %s641, 8
        %s643 = scalar_lea.vmem %s5, %s642
      $region60: #{tpu_custom_call.1} parent=55 // pred_fallthru
        _
    $region56: #{tpu_custom_call.1} parent=5 // pred_fallthru
      _
  $region6: #{tpu_custom_call.1} parent=0 // loop_footer
    %s15 = sadd.s32 1, %s11
  $region7: #{tpu_custom_call.1} parent=0 // loop_footer_branch
    %10 = sbr.rel target = $region3
  $region8: #{tpu_custom_call.1} parent=0 // loop_exit
    _

</llo_original>
